<compile_context>
chip_gen: v7x
topology: tpu7x:2x2x1
jax: 0.10.0
libtpu: 0.0.40
codegen_flags: <defaults>
</compile_context>

<pallas_src>
import functools
import math

import jax
import jax.numpy as jnp
from jax.experimental import pallas as pl
from jax.experimental.pallas import tpu as pltpu


MIN_GRID_STEPS = 8      # enough steps to hide prefetch/writeback + feed both v7x TCs
MAX_BLOCK_ROWS = 4096   # per-step latency cap


def _round_up(n, m):
    return ((n + m - 1) // m) * m


# ---------------------------------------------------------------------------
# Kernels
# ---------------------------------------------------------------------------

def _l2norm_kernel(x_ref, o_ref, *, eps, norm_eps):
    """groups == 1: normalize each row of the [block_rows, D] tile over D."""
    x = x_ref[...].astype(jnp.float32)
    ss = jnp.sum(x * x, axis=-1, keepdims=True)            # XLU lane reduce
    if norm_eps == 0:
        # x / max(||x||, eps) == x * rsqrt(max(ss, eps^2))   (EUP rsqrt)
        inv = jax.lax.rsqrt(jnp.maximum(ss, eps * eps))
        o_ref[...] = (x * inv).astype(o_ref.dtype)
    else:
        norm = jnp.sqrt(ss)
        d_norm = jnp.clip(norm, 1.0 - norm_eps, 1.0 + norm_eps)
        divisor = jnp.maximum(norm / d_norm, eps)
        o_ref[...] = (x / divisor).astype(o_ref.dtype)      # exact division


def _l2norm_grouped_kernel(x_ref, o_ref, *, eps, norm_eps, groups, gdim):
    """groups > 1: static (unrolled) loop over groups.

    Per-group lane-slice reduce + per-group lane-slice store. No MXU, no
    per-step selector construction; only one group's f32 temporaries are
    live at a time, keeping the VMEM footprint small.
    """
    for g in range(groups):
        lo, hi = g * gdim, (g + 1) * gdim
        xg = x_ref[:, lo:hi].astype(jnp.float32)
        ss = jnp.sum(xg * xg, axis=-1, keepdims=True)
        if norm_eps == 0:
            yg = xg * jax.lax.rsqrt(jnp.maximum(ss, eps * eps))
        else:
            norm = jnp.sqrt(ss)
            d_norm = jnp.clip(norm, 1.0 - norm_eps, 1.0 + norm_eps)
            yg = xg / jnp.maximum(norm / d_norm, eps)
        o_ref[:, lo:hi] = yg.astype(o_ref.dtype)


# ---------------------------------------------------------------------------
# 2D driver: tiling, padding, pallas_call
# ---------------------------------------------------------------------------

def _l2norm_2d(x2d, *, eps, norm_eps, groups):
    rows, dim = x2d.shape
    itemsize = int(jnp.dtype(x2d.dtype).itemsize)
    # Sublane packing: 8 rows f32, 16 bf16/f16, 32 int8/fp8.
    sub_mult = max(8, 32 // max(itemsize, 1))

    # VMEM capacity (v5e/v6e: 128 MiB, v7x: 64 MiB/TC). Conservative fallback.
    try:
        vmem_cap = int(pltpu.get_tpu_info().vmem_capacity_bytes)
    except Exception:  # pragma: no cover
        vmem_cap = 64 * 1024 * 1024

    # Per-row working-set bytes: 2x double-buffered (in + out) tiles in the
    # input dtype plus ~3 f32-tile temporaries (upcast / squares / product).
    wset_per_row = dim * (4 * itemsize + 3 * 4)
    budget = min(vmem_cap // 2, 48 << 20)

    rows_aligned = _round_up(rows, sub_mult)
    max_block_rows = max(sub_mult,
                         (budget // wset_per_row) // sub_mult * sub_mult)
    max_block_rows = min(max_block_rows, MAX_BLOCK_ROWS)

    # Guarantee a minimum number of grid steps (even, so v7x megacore splits
    # evenly) before applying the VMEM cap.
    n_steps = max(MIN_GRID_STEPS, pl.cdiv(rows_aligned, max_block_rows))
    if n_steps > 1 and n_steps % 2:
        n_steps += 1
    block_rows = min(_round_up(pl.cdiv(rows_aligned, n_steps), sub_mult),
                     max_block_rows)
    n_steps = pl.cdiv(rows_aligned, block_rows)

    # Pad rows so every grid step works on a full, aligned tile. Waste is
    # bounded by one (moderate) tile, i.e. ~1/n_steps of total traffic in the
    # worst case. Zero rows normalize to zero, so padding is numerically inert.
    rows_padded = n_steps * block_rows
    if rows_padded != rows:
        x2d = jnp.pad(x2d, ((0, rows_padded - rows), (0, 0)))
    grid = (n_steps,)

    # Scoped VMEM budget: double-buffered in/out tiles + f32 temps + headroom,
    # never above physical capacity.
    tile_bytes = block_rows * dim * itemsize
    f32_tile = block_rows * dim * 4
    vmem_limit = 4 * tile_bytes + 3 * f32_tile + (8 << 20)
    vmem_limit = min(vmem_cap, max(int(vmem_limit), 32 << 20))
    vmem_limit = min(vmem_limit, vmem_cap)

    if groups > 1:
        kernel = functools.partial(_l2norm_grouped_kernel, eps=eps,
                                   norm_eps=norm_eps, groups=groups,
                                   gdim=dim // groups)
    else:
        kernel = functools.partial(_l2norm_kernel, eps=eps, norm_eps=norm_eps)

    y2d = pl.pallas_call(
        kernel,
        out_shape=jax.ShapeDtypeStruct((rows_padded, dim), x2d.dtype),
        grid_spec=pltpu.PrefetchScalarGridSpec(
            num_scalar_prefetch=0,
            grid=grid,
            in_specs=[pl.BlockSpec((block_rows, dim), lambda i: (i, 0))],
            out_specs=pl.BlockSpec((block_rows, dim), lambda i: (i, 0)),
        ),
        compiler_params=pltpu.CompilerParams(
            dimension_semantics=("parallel",),
            vmem_limit_bytes=vmem_limit,
        ),
    )(x2d)

    return y2d[:rows] if rows_padded != rows else y2d


# ---------------------------------------------------------------------------
# Public API
# ---------------------------------------------------------------------------

def l2norm(x, d=-1, groups=1, eps=1e-06, norm_eps=0):
    """JAX/Pallas equivalent of the PyTorch l2Norm / L2Norm.forward."""
    if eps is None:
        eps = 1e-05 if x.dtype == jnp.float16 else 1e-10

    ndim = x.ndim
    axis = d % ndim
    moved = axis != ndim - 1
    # NOTE: for d != last axis this moveaxis is a full XLA transpose (extra
    # HBM round trip); the nGPT usage (d=-1) takes the transpose-free path.
    xm = jnp.moveaxis(x, axis, -1) if moved else x
    shape = xm.shape
    dim = shape[-1]
    if groups > 1:
        assert dim % groups == 0, "normalization dim must be divisible by groups"

    rows = math.prod(shape[:-1]) if ndim > 1 else 1
    x2d = xm.reshape(rows, dim)
    y2d = _l2norm_2d(x2d, eps=float(eps), norm_eps=float(norm_eps),
                     groups=int(groups))
    ym = y2d.reshape(shape)
    return jnp.moveaxis(ym, -1, axis) if moved else ym


class L2Norm:
    """Mirror of the PyTorch module (no parameters)."""

    def __init__(self, d=-1, groups=1, eps=1e-06, norm_eps=0):
        self.d = d
        self.groups = groups
        self.eps = eps
        self.norm_eps = norm_eps

    def __call__(self, x):
        return l2norm(x, d=self.d, groups=self.groups,
                      eps=self.eps, norm_eps=self.norm_eps)


# ---------------------------------------------------------------------------
# Pure-jnp reference (matches the PyTorch forward semantics)
# ---------------------------------------------------------------------------

def _reference(x, d=-1, groups=1, eps=1e-06, norm_eps=0):
    x = x.astype(jnp.float32)
    ndim = x.ndim
    axis = d % ndim
    xm = jnp.moveaxis(x, axis, -1)
    shp = xm.shape
    dim = shp[-1]
    gdim = dim // groups
    xg = xm.reshape(shp[:-1] + (groups, gdim))
    norm = jnp.sqrt(jnp.sum(xg * xg, axis=-1, keepdims=True))
    if norm_eps == 0:
        y = xg / jnp.maximum(norm, eps)
    else:
        d_norm = jnp.clip(norm, 1.0 - norm_eps, 1.0 + norm_eps)
        y = xg / jnp.maximum(norm / d_norm, eps)
    y = y.reshape(shp)
    return jnp.moveaxis(y, -1, axis)


if __name__ == "__main__":
    key = jax.random.PRNGKey(0)
    # Small shape consistent with nGPT-style usage: (batch, seq, hidden)
    B, S, H = 2, 8, 32
    x = jax.random.normal(key, (B, S, H), dtype=jnp.float32)

    # 1) default module config (d=-1, groups=1, norm_eps=0)
    mod = L2Norm(d=-1, groups=1, eps=1e-06, norm_eps=0)
    y = jax.block_until_ready(mod(x))
    y_ref = _reference(x)
    assert y.shape == x.shape and y.dtype == x.dtype
    assert jnp.allclose(y, y_ref, atol=1e-5, rtol=1e-5)

    # 2) groups > 1 and norm_eps != 0 (exact division path)
    mod2 = L2Norm(d=-1, groups=2, eps=1e-06, norm_eps=0.05)
    y2 = jax.block_until_ready(mod2(x))
    y2_ref = _reference(x, groups=2, norm_eps=0.05)
    assert jnp.allclose(y2, y2_ref, atol=1e-5, rtol=1e-5)

    # 3) ragged row count (exercises the row-padding path)
    x3 = jax.random.normal(jax.random.PRNGKey(1), (3, 5, 32), dtype=jnp.float32)
    y3 = jax.block_until_ready(L2Norm()(x3))
    y3_ref = _reference(x3)
    assert y3.shape == x3.shape
    assert jnp.allclose(y3, y3_ref, atol=1e-5, rtol=1e-5)

    # 4) bf16 input (exercises the 16-row sublane packing / f32-aware tiling)
    x4 = jax.random.normal(jax.random.PRNGKey(2), (2, 16, 256),
                           dtype=jnp.bfloat16)
    y4 = jax.block_until_ready(L2Norm()(x4))
    y4_ref = _reference(x4).astype(jnp.bfloat16)
    assert y4.dtype == jnp.bfloat16
    assert jnp.allclose(y4.astype(jnp.float32), y4_ref.astype(jnp.float32),
                        atol=1.5e-2, rtol=1.5e-2)

    print("KERNEL_OK")
</pallas_src>

<mosaic_0001>
module attributes {stable_mosaic.version = 11 : i64} {
  func.func @_l2norm_kernel(%arg0: i32, %arg1: memref<8x32xf32, #tpu.memory_space<vmem>>, %arg2: memref<8x32xf32, #tpu.memory_space<vmem>>) attributes {dimension_semantics = [#tpu.dimension_semantics<parallel>], iteration_bounds = array<i64: 2>, scalar_prefetch = 0 : i64, scratch_operands = 0 : i64, tpu.core_type = #tpu.core_type<tc>, window_params = [{transform_indices = @transform_0, window_bounds = array<i64: 8, 32>}, {transform_indices = @transform_1, window_bounds = array<i64: 8, 32>}]} {
    %c0 = arith.constant 0 : index
    %c0_0 = arith.constant 0 : index
    %0 = vector.load %arg1[%c0, %c0_0] : memref<8x32xf32, #tpu.memory_space<vmem>>, vector<8x32xf32>
    %1 = arith.mulf %0, %0 : vector<8x32xf32>
    %cst = arith.constant dense<0.000000e+00> : vector<8xf32>
    %2 = vector.multi_reduction <add>, %1, %cst [1] : vector<8x32xf32> to vector<8xf32>
    %3 = vector.shape_cast %2 : vector<8xf32> to vector<8x1xf32>
    %cst_1 = arith.constant 9.99999996E-13 : f32
    %4 = vector.broadcast %cst_1 : f32 to vector<8x1xf32>
    %5 = arith.maximumf %3, %4 : vector<8x1xf32>
    %6 = math.rsqrt %5 : vector<8x1xf32>
    %7 = vector.broadcast %6 : vector<8x1xf32> to vector<8x32xf32>
    %8 = arith.mulf %0, %7 : vector<8x32xf32>
    %c0_2 = arith.constant 0 : index
    %c0_3 = arith.constant 0 : index
    %9 = vector.load %arg2[%c0_2, %c0_3] : memref<8x32xf32, #tpu.memory_space<vmem>>, vector<8x32xf32>
    tpu.vector_store %arg2[%c0_2, %c0_3], %8 {strides = array<i32>} : memref<8x32xf32, #tpu.memory_space<vmem>>, vector<8x32xf32>,
    return
  }
  func.func @transform_0(%arg0: i32) -> (i32, i32) {
    %c0_i32 = arith.constant 0 : i32
    %c0_i32_0 = arith.constant 0 : i32
    return %arg0, %c0_i32 : i32, i32
  }
  func.func @transform_1(%arg0: i32) -> (i32, i32) {
    %c0_i32 = arith.constant 0 : i32
    %c0_i32_0 = arith.constant 0 : i32
    return %arg0, %c0_i32 : i32, i32
  }
}

</mosaic_0001>

<llo_original>
// kernel: tpu_custom_call.1
$region0: #{tpu_custom_call.1}
  #allocation0 [shape = 'u32[]', space=smem, size = 0x4, offset = 0x4, fixed_abs, tag = 'smem constant byte address 0x4 - core index']
  #allocation1 [shape = 'u32[144,128]{1,0:T(1,128)}', space=vmem, size = 0x12000, scoped, tag = 'internal scratch']
  %s0 = inlined_call_operand.hbm [shape: f32[16,32], index: 0, kind: input, shape index: {}]
  %s1 = inlined_call_operand.hbm [shape: f32[16,32], index: 1, kind: output, shape index: {}]
  %s2 = sld [smem:[#allocation0]]
  $region41: #{tpu_custom_call.1} parent=0
    _
  %s4 = ssub.s32 1, %s2
  %s5 = scalar_select 0, %s4, %s2
  $region1: #{tpu_custom_call.1} parent=0
    #allocation2 [shape = 'u8[8192]{0}', space=vmem, size = 0x2000, scoped, tag = 'input window, operand 0']
    #allocation3 [shape = 's32[2]{0}', space=sflag, size = 0x8, scoped, tag = 'scoped memory for tpu_custom_call.1']
    #allocation4 [shape = 's32[2]{0}', space=sflag, size = 0x8, scoped, tag = 'scoped memory for tpu_custom_call.1']
    #allocation5 [shape = 'u8[8192]{0}', space=vmem, size = 0x2000, scoped, tag = 'output window, operand 0']
    %6 = vsyncpa [#allocation3], 0
    %s7 = scalar_lea.sflag [#allocation3], 1
    %8 = vsyncpa %s7, 0
    %9 = vsyncpa [#allocation4], 0
    %s10 = scalar_lea.sflag [#allocation4], 1
    %11 = vsyncpa %s10, 0
    loop: start=0, step=1, limit=4
    $region2: #{tpu_custom_call.1} parent=1 // loop_pre_header
      _
    $region3: #{tpu_custom_call.1} parent=1 // loop_header
      %s13 = sphi 0, %s17
      %p14 = scmp.ge.s32.totalorder %s13, 4
      %s23 = sphi 0, %s25
      %s26 = sphi 0, %s23
      %s27 = sphi 0, %s26
      %s43 = sphi 0, %s27
      %s49 = sphi 0, %s51
      %s52 = sphi 0, %s49
      %s53 = sphi 0, %s52
      %s69 = sphi 0, %s53
    $region4: #{tpu_custom_call.1} parent=1 // loop_header_branch
      %16 = sbr.rel (%p14) target = $region8
    $region5: #{tpu_custom_call.1} parent=1 // loop_body
      %s18 = ssub.s32 %s13, 1
      %s19 = ssub.s32 %s13, 2
      %s20 = sadd.s32 %s13, 1
      %s21 = ssub.s32 %s13, %s20
      %p22 = scmp.eq.s32.totalorder %s21, 0
      %s24 = sadd.s32 %s23, 1
      %s25 = scalar_select %p22, %s23, %s24
      %p28 = pneg %p22
      %p29 = scmp.eq.s32.totalorder %s13, 1
      %p30 = por %p28, %p29
      %p31 = scmp.ne.s32.totalorder %s23, %s26
      %p32 = scmp.eq.s32.totalorder %s13, 0
      %p33 = por %p31, %p32
      %p34 = scmp.ne.s32.totalorder %s23, %s26
      %p35 = scmp.eq.s32.totalorder %s18, 1
      %p36 = por %p34, %p35
      %p37 = scmp.ne.s32.totalorder %s26, %s27
      %p38 = scmp.eq.s32.totalorder %s18, 0
      %p39 = por %p37, %p38
      %p40 = scmp.ne.s32.totalorder %s26, %s27
      %p41 = scmp.eq.s32.totalorder %s19, 1
      %p42 = por %p40, %p41
      %p44 = scmp.ne.s32.totalorder %s27, %s43
      %p45 = scmp.eq.s32.totalorder %s19, 0
      %p46 = por %p44, %p45
      %s47 = ssub.s32 %s13, %s20
      %p48 = scmp.eq.s32.totalorder %s47, 0
      %s50 = sadd.s32 %s49, 1
      %s51 = scalar_select %p48, %s49, %s50
      %p54 = pneg %p48
      %p55 = scmp.eq.s32.totalorder %s13, 1
      %p56 = por %p54, %p55
      %p57 = scmp.ne.s32.totalorder %s49, %s52
      %p58 = scmp.eq.s32.totalorder %s13, 0
      %p59 = por %p57, %p58
      %p60 = scmp.ne.s32.totalorder %s49, %s52
      %p61 = scmp.eq.s32.totalorder %s18, 1
      %p62 = por %p60, %p61
      %p63 = scmp.ne.s32.totalorder %s52, %s53
      %p64 = scmp.eq.s32.totalorder %s18, 0
      %p65 = por %p63, %p64
      %p66 = scmp.ne.s32.totalorder %s52, %s53
      %p67 = scmp.eq.s32.totalorder %s19, 1
      %p68 = por %p66, %p67
      %p70 = scmp.ne.s32.totalorder %s53, %s69
      %p71 = scmp.eq.s32.totalorder %s19, 0
      %p72 = por %p70, %p71
      %p73 = scmp.le.s32.totalorder 1, %s13
      %p74 = scmp.lt.s32.totalorder %s13, 3
      %p75 = pnand %p73, %p74
      %p76 = pneg %p75
      // Predicated region
      $region9: #{tpu_custom_call.1} parent=5 // pred_check
        _
      $region10: #{tpu_custom_call.1} parent=5 // pred_check_branch
        %78 = sbr.rel (%p75) target = $region12
      $region11: #{tpu_custom_call.1} parent=5 // pred_region
        %s79 = ssub.s32 %s13, 1
      $region12: #{tpu_custom_call.1} parent=5 // pred_fallthru
        _
      %p80 = scmp.lt.s32.totalorder %s13, 2
      // Predicated region
      $region13: #{tpu_custom_call.1} parent=5 // pred_check
        %p81 = pneg %p80
      $region14: #{tpu_custom_call.1} parent=5 // pred_check_branch
        %83 = sbr.rel (%p81) target = $region16
      $region15: #{tpu_custom_call.1} parent=5 // pred_region
        // Predicated region
        $region17: #{tpu_custom_call.1} parent=15 // pred_check
          %p84 = pneg %p33
        $region18: #{tpu_custom_call.1} parent=15 // pred_check_branch
          %86 = sbr.rel (%p84) target = $region20
        $region19: #{tpu_custom_call.1} parent=15 // pred_region
          %s87 = sand.u32 %s23, 1
          %s88 = scalar_lea.sflag [#allocation3], %s87
          %s89 = sand.u32 %s23, 1
          %s90 = smul.addr %s89, 8
          %s91 = scalar_lea.vmem [#allocation2], %s90
          %s93 = ssub.s32 128, 128
          %94 = vsyncadd %s88, %s93
          %s95 = smul.addr %s13, 128
          %s96 = scalar_lea.hbm %s0, %s95
          %s98 = sshll.u32 %s91, 4
          %s99 = int_to_ptr.vmem [resolvable:$true] %s98
          %101 = dma.hbm_to_vmem [thread:$0]  %s96, 128, %s99, %s88
        $region20: #{tpu_custom_call.1} parent=15 // pred_fallthru
          _
      $region16: #{tpu_custom_call.1} parent=5 // pred_fallthru
        _
      %p102 = scmp.le.s32.totalorder 1, %s13
      %p103 = scmp.lt.s32.totalorder %s13, 3
      %p104 = pnand %p102, %p103
      %p105 = pneg %p104
      // Predicated region
      $region21: #{tpu_custom_call.1} parent=5 // pred_check
        _
      $region22: #{tpu_custom_call.1} parent=5 // pred_check_branch
        %107 = sbr.rel (%p104) target = $region24
      $region23: #{tpu_custom_call.1} parent=5 // pred_region
        %s108 = ssub.s32 %s13, 1
        %s109 = sand.u32 %s26, 1
        %s110 = scalar_lea.sflag [#allocation3], %s109
        %s111 = sand.u32 %s26, 1
        %s112 = smul.addr %s111, 8
        %s113 = scalar_lea.vmem [#allocation2], %s112
        // Predicated region
        $region25: #{tpu_custom_call.1} parent=23 // pred_check
          %p114 = pneg %p39
        $region26: #{tpu_custom_call.1} parent=23 // pred_check_branch
          %116 = sbr.rel (%p114) target = $region28
        $region27: #{tpu_custom_call.1} parent=23 // pred_region
          %117 = dma.done %s110, 128
        $region28: #{tpu_custom_call.1} parent=23 // pred_fallthru
          _
        %s118 = sand.u32 %s26, 1
        %s119 = scalar_lea.sflag [#allocation3], %s118
        %s120 = sand.u32 %s26, 1
        %s121 = smul.addr %s120, 8
        %s122 = scalar_lea.vmem [#allocation2], %s121
        %p123 = pneg %p39
        %p124 = pneg %p36
        %p125 = pneg %p65
        %p126 = pneg %p62
        %s127 = sand.u32 %s52, 1
        %s128 = scalar_lea.sflag [#allocation4], %s127
        %s129 = sand.u32 %s52, 1
        %s130 = smul.addr %s129, 8
        %s131 = scalar_lea.vmem [#allocation5], %s130
        %v132 = vld [vmem:[%s113] sm:$0xff]
        %v133 = vmul.f32 %v132, %v132
        %vm134 = vcmask 261120
        %v135 = vsel %vm134, %v133, 0.0
        %136 = vadd.xlane.f32.xlu0 %v135
        %v137 = vpop.xlane.xlu0 %136
        %v138 = vmax.f32 %v137, 1e-12
        %v139 = vrsqrt.pop %v138
        %v140 = vmul.f32 %v132, %v139
        %141 = vst.msk [vmem:[%s131] sm:$0xff] %vm134, %v140
        %s142 = sand.u32 %s52, 1
        %s143 = scalar_lea.sflag [#allocation4], %s142
        %s144 = sand.u32 %s52, 1
        %s145 = smul.addr %s144, 8
        %s146 = scalar_lea.vmem [#allocation5], %s145
        // Predicated region
        $region29: #{tpu_custom_call.1} parent=23 // pred_check
          %p147 = pneg %p62
        $region30: #{tpu_custom_call.1} parent=23 // pred_check_branch
          %149 = sbr.rel (%p147) target = $region32
        $region31: #{tpu_custom_call.1} parent=23 // pred_region
          %s151 = ssub.s32 128, 128
          %152 = vsyncadd %s143, %s151
          %s153 = smul.addr %s18, 128
          %s154 = scalar_lea.hbm %s1, %s153
          %s156 = sshll.u32 %s146, 4
          %s157 = int_to_ptr.vmem [resolvable:$true] %s156
          %159 = dma.vmem_to_hbm [thread:$0]  %s157, 128, %s154, %s143
        $region32: #{tpu_custom_call.1} parent=23 // pred_fallthru
          _
      $region24: #{tpu_custom_call.1} parent=5 // pred_fallthru
        _
      %p160 = scmp.le.s32.totalorder 2, %s13
      // Predicated region
      $region33: #{tpu_custom_call.1} parent=5 // pred_check
        %p161 = pneg %p160
      $region34: #{tpu_custom_call.1} parent=5 // pred_check_branch
        %163 = sbr.rel (%p161) target = $region36
      $region35: #{tpu_custom_call.1} parent=5 // pred_region
        %s164 = ssub.s32 %s13, 2
        // Predicated region
        $region37: #{tpu_custom_call.1} parent=35 // pred_check
          %p165 = pneg %p68
        $region38: #{tpu_custom_call.1} parent=35 // pred_check_branch
          %167 = sbr.rel (%p165) target = $region40
        $region39: #{tpu_custom_call.1} parent=35 // pred_region
          %s168 = sand.u32 %s53, 1
          %s169 = scalar_lea.sflag [#allocation4], %s168
          %s170 = sand.u32 %s53, 1
          %s171 = smul.addr %s170, 8
          %s172 = scalar_lea.vmem [#allocation5], %s171
          %173 = dma.done %s169, 128
        $region40: #{tpu_custom_call.1} parent=35 // pred_fallthru
          _
      $region36: #{tpu_custom_call.1} parent=5 // pred_fallthru
        _
    $region6: #{tpu_custom_call.1} parent=1 // loop_footer
      %s17 = sadd.s32 1, %s13
    $region7: #{tpu_custom_call.1} parent=1 // loop_footer_branch
      %12 = sbr.rel target = $region3
    $region8: #{tpu_custom_call.1} parent=1 // loop_exit
      _
    %174 = vsyncpa [#allocation3], 1
    %s175 = scalar_lea.sflag [#allocation3], 1
    %176 = vsyncpa %s175, 1
    %177 = vsyncpa [#allocation4], 1
    %s178 = scalar_lea.sflag [#allocation4], 1
    %179 = vsyncpa %s178, 1

</llo_original>
